<compile_context>
chip_gen: v5e
topology: v5e:2x2
jax: 0.10.0
libtpu: 0.0.40
codegen_flags: <defaults>
</compile_context>

<pallas_src>
import functools

import jax
import jax.numpy as jnp
from jax import lax
from jax.experimental import pallas as pl
from jax.experimental.pallas import tpu as pltpu

_SUBLANE = 8
_LANE = 128


def _round_up(v, m):
    return (v + m - 1) // m * m


def _lstm_kernel(x_ref, w_ih_ref, w_hh_ref, b_ref, out_ref,
                 h_ref, c_ref, xp_ref, *, seq_len):
    # One (batch-block, time-chunk) grid step of the LSTM recurrence.
    #   x_ref:    (Tc, Bb, I)     time chunk of the time-major, padded input
    #   w_ih_ref: (I,  4*Hp)      pre-transposed input weights, gate order [i, f, o, g]
    #   w_hh_ref: (Hp, 4*Hp)      pre-transposed recurrent weights, same order / padding
    #   b_ref:    (1,  4*Hp)      b_ih + b_hh (f32), reordered + padded
    #   out_ref:  (Bb, Hp)        final hidden state for this batch block (lane-dense)
    #   h_ref/c_ref: (Bb, Hp) f32 scratch carrying the recurrent state across time chunks
    #   xp_ref:   (Tc, Bb, 4*Hp)  f32 scratch holding the hoisted input projection
    t_idx = pl.program_id(1)
    Tc, Bb, I = x_ref.shape
    Hp = w_hh_ref.shape[0]

    @pl.when(t_idx == 0)
    def _():
        h_ref[...] = jnp.zeros_like(h_ref)
        c_ref[...] = jnp.zeros_like(c_ref)

    # Hoisted input projection for this chunk (bias folded in), written to VMEM scratch so
    # the serial loop only does h @ W_hh + xp[t].
    b_row = b_ref[...].reshape(1, 1, 4 * Hp)
    if I == 1:
        # K=1 contraction -> VPU broadcast FMA is strictly cheaper than an MXU matmul.
        w_row = w_ih_ref[...].astype(jnp.float32).reshape(1, 1, 4 * Hp)
        xp_ref[...] = x_ref[...].astype(jnp.float32) * w_row + b_row
    else:
        x2d = x_ref[...].reshape(Tc * Bb, I).astype(w_ih_ref.dtype)
        xp = jnp.dot(x2d, w_ih_ref[...], preferred_element_type=jnp.float32)
        xp_ref[...] = xp.reshape(Tc, Bb, 4 * Hp) + b_row

    w_hh = w_hh_ref[...]  # f32 or bf16 (MXU input dtype chosen by the wrapper)

    def step(t, carry):
        h, c = carry
        gates = xp_ref[t] + jnp.dot(h.astype(w_hh.dtype), w_hh,
                                    preferred_element_type=jnp.float32)
        # sigmoid(x) == 0.5*tanh(0.5*x)+0.5: one EUP push over the lane-aligned [i|f|o]
        # slab + VPU FMA, no divide, on the serial critical path.
        sig = 0.5 * jnp.tanh(0.5 * gates[:, : 3 * Hp]) + 0.5
        i_g = sig[:, 0 * Hp:1 * Hp]
        f_g = sig[:, 1 * Hp:2 * Hp]
        o_g = sig[:, 2 * Hp:3 * Hp]
        g_g = jnp.tanh(gates[:, 3 * Hp:])
        c_new = f_g * c + i_g * g_g
        h_new = o_g * jnp.tanh(c_new)
        return h_new, c_new

    h0 = h_ref[...]
    c0 = c_ref[...]
    if seq_len % Tc == 0:
        # Every chunk is full -> static trip count, unrolled for LLO scheduler visibility.
        h, c = lax.fori_loop(0, Tc, step, (h0, c0), unroll=True)
    else:
        # Ragged last chunk -> dynamic trip count; padded timesteps are never touched.
        n_valid = jnp.minimum(Tc, seq_len - t_idx * Tc)
        h, c = lax.fori_loop(0, n_valid, step, (h0, c0))

    h_ref[...] = h
    c_ref[...] = c
    # Lane-dense output (the H -> 1 fc projection runs as a JAX epilogue in the wrapper).
    out_ref[...] = h.astype(out_ref.dtype)


def lstm_forward(x, w_ih, w_hh, b_ih, b_hh, w_fc, b_fc, *,
                 mxu_dtype=jnp.float32, time_chunk=32, max_batch_block=256):
    """x: (B, T, I); weights in PyTorch nn.LSTM / nn.Linear layout (gate order [i, f, g, o]).

    mxu_dtype=jnp.bfloat16 feeds bf16 weights/h into the MXU (full rate on v6e/v7x) while
    keeping state math and accumulation in f32.
    """
    B, T, I = x.shape
    H = w_hh.shape[1]

    Hp = _round_up(H, _LANE)   # TODO(synk): round Hp to 256 on v6e/v7x once H > 128.
    Bb = min(_round_up(B, _SUBLANE), _round_up(max_batch_block, _SUBLANE))
    Bp = _round_up(B, Bb)      # total padded batch = multiple of the batch block
    Tc = min(T, time_chunk)
    NT = pl.cdiv(T, Tc)
    Tp = NT * Tc
    NB = Bp // Bb

    def _regate(w, in_dim, in_pad, dtype):
        # (4H, in_dim), gate order [i,f,g,o] -> (in_pad, 4*Hp) transposed, gate order
        # [i,f,o,g], zero-padded (padded hidden units stay exactly 0 through the recurrence
        # given zero initial h0/c0).
        gi, gf, gg, go = jnp.split(w, 4, axis=0)
        gates = [jnp.pad(g, ((0, Hp - H), (0, in_pad - in_dim)))
                 for g in (gi, gf, go, gg)]
        return jnp.concatenate(gates, axis=0).T.astype(dtype)

    w_ih_r = _regate(w_ih, I, I, mxu_dtype)      # (I,  4*Hp)
    w_hh_r = _regate(w_hh, H, Hp, mxu_dtype)     # (Hp, 4*Hp)

    b = (b_ih + b_hh).astype(jnp.float32)
    bi, bf, bg, bo = jnp.split(b, 4)
    pad1 = lambda v: jnp.pad(v, (0, Hp - H))
    b_r = jnp.concatenate([pad1(bi), pad1(bf), pad1(bo), pad1(bg)]).reshape(1, 4 * Hp)

    # Time-major; pad batch to the batch-block size and time to a chunk multiple.
    x_tm = jnp.transpose(x, (1, 0, 2))                     # (T, B, I)
    x_tm = jnp.pad(x_tm, ((0, Tp - T), (0, Bp - B), (0, 0)))

    kernel = functools.partial(_lstm_kernel, seq_len=T)

    h_last = pl.pallas_call(
        kernel,
        out_shape=jax.ShapeDtypeStruct((Bp, Hp), jnp.float32),
        grid_spec=pltpu.PrefetchScalarGridSpec(
            num_scalar_prefetch=0,
            grid=(NB, NT),
            in_specs=[
                pl.BlockSpec((Tc, Bb, I), lambda bi_, ti: (ti, bi_, 0)),  # x chunk (pipelined)
                pl.BlockSpec((I, 4 * Hp), lambda bi_, ti: (0, 0)),        # W_ih^T (resident)
                pl.BlockSpec((Hp, 4 * Hp), lambda bi_, ti: (0, 0)),       # W_hh^T (resident)
                pl.BlockSpec((1, 4 * Hp), lambda bi_, ti: (0, 0)),        # biases (resident)
            ],
            out_specs=pl.BlockSpec((Bb, Hp), lambda bi_, ti: (bi_, 0)),   # final h, lane-dense
            scratch_shapes=[
                pltpu.VMEM((Bb, Hp), jnp.float32),           # h carry
                pltpu.VMEM((Bb, Hp), jnp.float32),           # c carry
                pltpu.VMEM((Tc, Bb, 4 * Hp), jnp.float32),   # hoisted input projection
            ],
        ),
        compiler_params=pltpu.CompilerParams(
            dimension_semantics=("parallel", "arbitrary"),
        ),
    )(x_tm, w_ih_r, w_hh_r, b_r)

    # fc epilogue on the last timestep's hidden state (kernel output is lane-dense).
    return h_last[:B, :H] @ w_fc.T.astype(jnp.float32) + b_fc.astype(jnp.float32)


def _reference_forward(x, w_ih, w_hh, b_ih, b_hh, w_fc, b_fc):
    """Pure-JAX reference mirroring torch.nn.LSTM + Linear semantics (original layout)."""
    B, T, _ = x.shape
    H = w_hh.shape[1]
    h = jnp.zeros((B, H), jnp.float32)
    c = jnp.zeros((B, H), jnp.float32)
    for t in range(T):
        gates = x[:, t, :] @ w_ih.T + h @ w_hh.T + b_ih + b_hh
        i_g = jax.nn.sigmoid(gates[:, 0 * H:1 * H])
        f_g = jax.nn.sigmoid(gates[:, 1 * H:2 * H])
        g_g = jnp.tanh(gates[:, 2 * H:3 * H])
        o_g = jax.nn.sigmoid(gates[:, 3 * H:4 * H])
        c = f_g * c + i_g * g_g
        h = o_g * jnp.tanh(c)
    return h @ w_fc.T + b_fc


if __name__ == "__main__":
    # Module hyperparameters implied by __init__ defaults.
    input_size = 1
    hidden_size = 4
    seq_len = 7
    batch = 4

    key = jax.random.PRNGKey(0)
    k_x, k1, k2, k3, k4, k5, k6 = jax.random.split(key, 7)

    # PyTorch-style uniform(-1/sqrt(H), 1/sqrt(H)) init, deterministic.
    bound = 1.0 / (hidden_size ** 0.5)
    u = lambda k, shape: jax.random.uniform(k, shape, jnp.float32, -bound, bound)

    x = jax.random.normal(k_x, (batch, seq_len, input_size), jnp.float32)
    w_ih = u(k1, (4 * hidden_size, input_size))
    w_hh = u(k2, (4 * hidden_size, hidden_size))
    b_ih = u(k3, (4 * hidden_size,))
    b_hh = u(k4, (4 * hidden_size,))
    w_fc = u(k5, (1, hidden_size))
    b_fc = u(k6, (1,))

    ref = _reference_forward(x, w_ih, w_hh, b_ih, b_hh, w_fc, b_fc)

    # f32 MXU path (v5e-friendly), strict check.
    out = jax.block_until_ready(lstm_forward(x, w_ih, w_hh, b_ih, b_hh, w_fc, b_fc))
    assert out.shape == (batch, 1), out.shape
    assert jnp.allclose(out, ref, atol=2e-4, rtol=2e-4), (out, ref)

    # bf16-weight MXU path (full-rate MXU on v6e/v7x), f32 state/accumulation.
    out_bf16 = jax.block_until_ready(
        lstm_forward(x, w_ih, w_hh, b_ih, b_hh, w_fc, b_fc, mxu_dtype=jnp.bfloat16))
    assert jnp.allclose(out_bf16, ref, atol=5e-2, rtol=5e-2), (out_bf16, ref)

    print("KERNEL_OK")
</pallas_src>

<mosaic_0001>
module attributes {stable_mosaic.version = 11 : i64} {
  func.func @_lstm_kernel(%arg0: i32, %arg1: i32, %arg2: memref<7x8x1xf32, #tpu.memory_space<vmem>>, %arg3: memref<1x512xf32, #tpu.memory_space<vmem>>, %arg4: memref<128x512xf32, #tpu.memory_space<vmem>>, %arg5: memref<1x512xf32, #tpu.memory_space<vmem>>, %arg6: memref<8x128xf32, #tpu.memory_space<vmem>>, %arg7: memref<8x128xf32, #tpu.memory_space<vmem>>, %arg8: memref<8x128xf32, #tpu.memory_space<vmem>>, %arg9: memref<7x8x512xf32, #tpu.memory_space<vmem>>) attributes {dimension_semantics = [#tpu.dimension_semantics<parallel>, #tpu.dimension_semantics<arbitrary>], iteration_bounds = array<i64: 1, 1>, scalar_prefetch = 0 : i64, scratch_operands = 3 : i64, tpu.core_type = #tpu.core_type<tc>, window_params = [{transform_indices = @transform_0, window_bounds = array<i64: 7, 8, 1>}, {pipeline_mode = #tpu.pipeline_mode<synchronous>, transform_indices = @transform_1, window_bounds = array<i64: 1, 512>}, {pipeline_mode = #tpu.pipeline_mode<synchronous>, transform_indices = @transform_2, window_bounds = array<i64: 128, 512>}, {pipeline_mode = #tpu.pipeline_mode<synchronous>, transform_indices = @transform_3, window_bounds = array<i64: 1, 512>}, {transform_indices = @transform_4, window_bounds = array<i64: 8, 128>}]} {
    %c0_i32 = arith.constant 0 : i32
    %0 = arith.cmpi eq, %arg1, %c0_i32 : i32
    %1 = arith.extui %0 : i1 to i32
    %c0_i32_0 = arith.constant 0 : i32
    %2 = arith.cmpi ne, %1, %c0_i32_0 : i32
    scf.if %2 {
      %cst_64 = arith.constant 0.000000e+00 : f32
      %181 = vector.broadcast %cst_64 : f32 to vector<8x128xf32>
      %c0_65 = arith.constant 0 : index
      %c0_66 = arith.constant 0 : index
      %182 = vector.load %arg7[%c0_65, %c0_66] : memref<8x128xf32, #tpu.memory_space<vmem>>, vector<8x128xf32>
      tpu.vector_store %arg7[%c0_65, %c0_66], %181 {strides = array<i32>} : memref<8x128xf32, #tpu.memory_space<vmem>>, vector<8x128xf32>,
      %cst_67 = arith.constant 0.000000e+00 : f32
      %183 = vector.broadcast %cst_67 : f32 to vector<8x128xf32>
      %c0_68 = arith.constant 0 : index
      %c0_69 = arith.constant 0 : index
      %184 = vector.load %arg8[%c0_68, %c0_69] : memref<8x128xf32, #tpu.memory_space<vmem>>, vector<8x128xf32>
      tpu.vector_store %arg8[%c0_68, %c0_69], %183 {strides = array<i32>} : memref<8x128xf32, #tpu.memory_space<vmem>>, vector<8x128xf32>,
    } else {
    }
    %c0 = arith.constant 0 : index
    %c0_1 = arith.constant 0 : index
    %3 = vector.load %arg5[%c0, %c0_1] : memref<1x512xf32, #tpu.memory_space<vmem>>, vector<1x512xf32>
    %4 = vector.shape_cast %3 : vector<1x512xf32> to vector<1x1x512xf32>
    %c0_2 = arith.constant 0 : index
    %c0_3 = arith.constant 0 : index
    %5 = vector.load %arg3[%c0_2, %c0_3] : memref<1x512xf32, #tpu.memory_space<vmem>>, vector<1x512xf32>
    %6 = vector.shape_cast %5 : vector<1x512xf32> to vector<1x1x512xf32>
    %c0_4 = arith.constant 0 : index
    %c0_5 = arith.constant 0 : index
    %c0_6 = arith.constant 0 : index
    %7 = vector.load %arg2[%c0_4, %c0_5, %c0_6] : memref<7x8x1xf32, #tpu.memory_space<vmem>>, vector<7x8x1xf32>
    %8 = vector.broadcast %7 : vector<7x8x1xf32> to vector<7x8x512xf32>
    %9 = vector.broadcast %6 : vector<1x1x512xf32> to vector<7x8x512xf32>
    %10 = arith.mulf %8, %9 : vector<7x8x512xf32>
    %11 = vector.broadcast %4 : vector<1x1x512xf32> to vector<7x8x512xf32>
    %12 = arith.addf %10, %11 : vector<7x8x512xf32>
    %c0_7 = arith.constant 0 : index
    %c0_8 = arith.constant 0 : index
    %c0_9 = arith.constant 0 : index
    %13 = vector.load %arg9[%c0_7, %c0_8, %c0_9] : memref<7x8x512xf32, #tpu.memory_space<vmem>>, vector<7x8x512xf32>
    tpu.vector_store %arg9[%c0_7, %c0_8, %c0_9], %12 {strides = array<i32>} : memref<7x8x512xf32, #tpu.memory_space<vmem>>, vector<7x8x512xf32>,
    %c0_10 = arith.constant 0 : index
    %c0_11 = arith.constant 0 : index
    %14 = vector.load %arg4[%c0_10, %c0_11] : memref<128x512xf32, #tpu.memory_space<vmem>>, vector<128x512xf32>
    %c0_12 = arith.constant 0 : index
    %c0_13 = arith.constant 0 : index
    %15 = vector.load %arg7[%c0_12, %c0_13] : memref<8x128xf32, #tpu.memory_space<vmem>>, vector<8x128xf32>
    %c0_14 = arith.constant 0 : index
    %c0_15 = arith.constant 0 : index
    %16 = vector.load %arg8[%c0_14, %c0_15] : memref<8x128xf32, #tpu.memory_space<vmem>>, vector<8x128xf32>
    %c0_i32_16 = arith.constant 0 : i32
    %17 = arith.index_cast %c0_i32_16 : i32 to index
    %c0_17 = arith.constant 0 : index
    %c0_18 = arith.constant 0 : index
    %18 = vector.load %arg9[%17, %c0_17, %c0_18] : memref<7x8x512xf32, #tpu.memory_space<vmem>>, vector<1x8x512xf32>
    %19 = vector.shape_cast %18 : vector<1x8x512xf32> to vector<8x512xf32>
    %cst = arith.constant dense<0.000000e+00> : vector<8x512xf32>
    %20 = tpu.matmul %15, %14, %cst {dimension_numbers = #tpu.dot_dimension_numbers<[1], [0], [0], [1], [0, 0, 1, 1], [], []>} : vector<8x128xf32>, vector<128x512xf32>, vector<8x512xf32> -> vector<8x512xf32>
    %21 = arith.addf %19, %20 : vector<8x512xf32>
    %22 = vector.extract_strided_slice %21 {offsets = [0, 0], sizes = [8, 384], strides = [1, 1]} : vector<8x512xf32> to vector<8x384xf32>
    %cst_19 = arith.constant 5.000000e-01 : f32
    %23 = vector.broadcast %cst_19 : f32 to vector<8x384xf32>
    %24 = arith.mulf %23, %22 : vector<8x384xf32>
    %25 = math.tanh %24 : vector<8x384xf32>
    %cst_20 = arith.constant 5.000000e-01 : f32
    %26 = vector.broadcast %cst_20 : f32 to vector<8x384xf32>
    %27 = arith.mulf %26, %25 : vector<8x384xf32>
    %cst_21 = arith.constant 5.000000e-01 : f32
    %28 = vector.broadcast %cst_21 : f32 to vector<8x384xf32>
    %29 = arith.addf %27, %28 : vector<8x384xf32>
    %30 = vector.extract_strided_slice %29 {offsets = [0, 0], sizes = [8, 128], strides = [1, 1]} : vector<8x384xf32> to vector<8x128xf32>
    %31 = vector.extract_strided_slice %29 {offsets = [0, 128], sizes = [8, 128], strides = [1, 1]} : vector<8x384xf32> to vector<8x128xf32>
    %32 = vector.extract_strided_slice %29 {offsets = [0, 256], sizes = [8, 128], strides = [1, 1]} : vector<8x384xf32> to vector<8x128xf32>
    %33 = vector.extract_strided_slice %21 {offsets = [0, 384], sizes = [8, 128], strides = [1, 1]} : vector<8x512xf32> to vector<8x128xf32>
    %34 = math.tanh %33 : vector<8x128xf32>
    %35 = arith.mulf %31, %16 : vector<8x128xf32>
    %36 = arith.mulf %30, %34 : vector<8x128xf32>
    %37 = arith.addf %35, %36 : vector<8x128xf32>
    %38 = math.tanh %37 : vector<8x128xf32>
    %39 = arith.mulf %32, %38 : vector<8x128xf32>
    %c1_i32 = arith.constant 1 : i32
    %40 = arith.index_cast %c1_i32 : i32 to index
    %c0_22 = arith.constant 0 : index
    %c0_23 = arith.constant 0 : index
    %41 = vector.load %arg9[%40, %c0_22, %c0_23] : memref<7x8x512xf32, #tpu.memory_space<vmem>>, vector<1x8x512xf32>
    %42 = vector.shape_cast %41 : vector<1x8x512xf32> to vector<8x512xf32>
    %cst_24 = arith.constant dense<0.000000e+00> : vector<8x512xf32>
    %43 = tpu.matmul %39, %14, %cst_24 {dimension_numbers = #tpu.dot_dimension_numbers<[1], [0], [0], [1], [0, 0, 1, 1], [], []>} : vector<8x128xf32>, vector<128x512xf32>, vector<8x512xf32> -> vector<8x512xf32>
    %44 = arith.addf %42, %43 : vector<8x512xf32>
    %45 = vector.extract_strided_slice %44 {offsets = [0, 0], sizes = [8, 384], strides = [1, 1]} : vector<8x512xf32> to vector<8x384xf32>
    %cst_25 = arith.constant 5.000000e-01 : f32
    %46 = vector.broadcast %cst_25 : f32 to vector<8x384xf32>
    %47 = arith.mulf %46, %45 : vector<8x384xf32>
    %48 = math.tanh %47 : vector<8x384xf32>
    %cst_26 = arith.constant 5.000000e-01 : f32
    %49 = vector.broadcast %cst_26 : f32 to vector<8x384xf32>
    %50 = arith.mulf %49, %48 : vector<8x384xf32>
    %cst_27 = arith.constant 5.000000e-01 : f32
    %51 = vector.broadcast %cst_27 : f32 to vector<8x384xf32>
    %52 = arith.addf %50, %51 : vector<8x384xf32>
    %53 = vector.extract_strided_slice %52 {offsets = [0, 0], sizes = [8, 128], strides = [1, 1]} : vector<8x384xf32> to vector<8x128xf32>
    %54 = vector.extract_strided_slice %52 {offsets = [0, 128], sizes = [8, 128], strides = [1, 1]} : vector<8x384xf32> to vector<8x128xf32>
    %55 = vector.extract_strided_slice %52 {offsets = [0, 256], sizes = [8, 128], strides = [1, 1]} : vector<8x384xf32> to vector<8x128xf32>
    %56 = vector.extract_strided_slice %44 {offsets = [0, 384], sizes = [8, 128], strides = [1, 1]} : vector<8x512xf32> to vector<8x128xf32>
    %57 = math.tanh %56 : vector<8x128xf32>
    %58 = arith.mulf %54, %37 : vector<8x128xf32>
    %59 = arith.mulf %53, %57 : vector<8x128xf32>
    %60 = arith.addf %58, %59 : vector<8x128xf32>
    %61 = math.tanh %60 : vector<8x128xf32>
    %62 = arith.mulf %55, %61 : vector<8x128xf32>
    %c2_i32 = arith.constant 2 : i32
    %63 = arith.index_cast %c2_i32 : i32 to index
    %c0_28 = arith.constant 0 : index
    %c0_29 = arith.constant 0 : index
    %64 = vector.load %arg9[%63, %c0_28, %c0_29] : memref<7x8x512xf32, #tpu.memory_space<vmem>>, vector<1x8x512xf32>
    %65 = vector.shape_cast %64 : vector<1x8x512xf32> to vector<8x512xf32>
    %cst_30 = arith.constant dense<0.000000e+00> : vector<8x512xf32>
    %66 = tpu.matmul %62, %14, %cst_30 {dimension_numbers = #tpu.dot_dimension_numbers<[1], [0], [0], [1], [0, 0, 1, 1], [], []>} : vector<8x128xf32>, vector<128x512xf32>, vector<8x512xf32> -> vector<8x512xf32>
    %67 = arith.addf %65, %66 : vector<8x512xf32>
    %68 = vector.extract_strided_slice %67 {offsets = [0, 0], sizes = [8, 384], strides = [1, 1]} : vector<8x512xf32> to vector<8x384xf32>
    %cst_31 = arith.constant 5.000000e-01 : f32
    %69 = vector.broadcast %cst_31 : f32 to vector<8x384xf32>
    %70 = arith.mulf %69, %68 : vector<8x384xf32>
    %71 = math.tanh %70 : vector<8x384xf32>
    %cst_32 = arith.constant 5.000000e-01 : f32
    %72 = vector.broadcast %cst_32 : f32 to vector<8x384xf32>
    %73 = arith.mulf %72, %71 : vector<8x384xf32>
    %cst_33 = arith.constant 5.000000e-01 : f32
    %74 = vector.broadcast %cst_33 : f32 to vector<8x384xf32>
    %75 = arith.addf %73, %74 : vector<8x384xf32>
    %76 = vector.extract_strided_slice %75 {offsets = [0, 0], sizes = [8, 128], strides = [1, 1]} : vector<8x384xf32> to vector<8x128xf32>
    %77 = vector.extract_strided_slice %75 {offsets = [0, 128], sizes = [8, 128], strides = [1, 1]} : vector<8x384xf32> to vector<8x128xf32>
    %78 = vector.extract_strided_slice %75 {offsets = [0, 256], sizes = [8, 128], strides = [1, 1]} : vector<8x384xf32> to vector<8x128xf32>
    %79 = vector.extract_strided_slice %67 {offsets = [0, 384], sizes = [8, 128], strides = [1, 1]} : vector<8x512xf32> to vector<8x128xf32>
    %80 = math.tanh %79 : vector<8x128xf32>
    %81 = arith.mulf %77, %60 : vector<8x128xf32>
    %82 = arith.mulf %76, %80 : vector<8x128xf32>
    %83 = arith.addf %81, %82 : vector<8x128xf32>
    %84 = math.tanh %83 : vector<8x128xf32>
    %85 = arith.mulf %78, %84 : vector<8x128xf32>
    %c3_i32 = arith.constant 3 : i32
    %86 = arith.index_cast %c3_i32 : i32 to index
    %c0_34 = arith.constant 0 : index
    %c0_35 = arith.constant 0 : index
    %87 = vector.load %arg9[%86, %c0_34, %c0_35] : memref<7x8x512xf32, #tpu.memory_space<vmem>>, vector<1x8x512xf32>
    %88 = vector.shape_cast %87 : vector<1x8x512xf32> to vector<8x512xf32>
    %cst_36 = arith.constant dense<0.000000e+00> : vector<8x512xf32>
    %89 = tpu.matmul %85, %14, %cst_36 {dimension_numbers = #tpu.dot_dimension_numbers<[1], [0], [0], [1], [0, 0, 1, 1], [], []>} : vector<8x128xf32>, vector<128x512xf32>, vector<8x512xf32> -> vector<8x512xf32>
    %90 = arith.addf %88, %89 : vector<8x512xf32>
    %91 = vector.extract_strided_slice %90 {offsets = [0, 0], sizes = [8, 384], strides = [1, 1]} : vector<8x512xf32> to vector<8x384xf32>
    %cst_37 = arith.constant 5.000000e-01 : f32
    %92 = vector.broadcast %cst_37 : f32 to vector<8x384xf32>
    %93 = arith.mulf %92, %91 : vector<8x384xf32>
    %94 = math.tanh %93 : vector<8x384xf32>
    %cst_38 = arith.constant 5.000000e-01 : f32
    %95 = vector.broadcast %cst_38 : f32 to vector<8x384xf32>
    %96 = arith.mulf %95, %94 : vector<8x384xf32>
    %cst_39 = arith.constant 5.000000e-01 : f32
    %97 = vector.broadcast %cst_39 : f32 to vector<8x384xf32>
    %98 = arith.addf %96, %97 : vector<8x384xf32>
    %99 = vector.extract_strided_slice %98 {offsets = [0, 0], sizes = [8, 128], strides = [1, 1]} : vector<8x384xf32> to vector<8x128xf32>
    %100 = vector.extract_strided_slice %98 {offsets = [0, 128], sizes = [8, 128], strides = [1, 1]} : vector<8x384xf32> to vector<8x128xf32>
    %101 = vector.extract_strided_slice %98 {offsets = [0, 256], sizes = [8, 128], strides = [1, 1]} : vector<8x384xf32> to vector<8x128xf32>
    %102 = vector.extract_strided_slice %90 {offsets = [0, 384], sizes = [8, 128], strides = [1, 1]} : vector<8x512xf32> to vector<8x128xf32>
    %103 = math.tanh %102 : vector<8x128xf32>
    %104 = arith.mulf %100, %83 : vector<8x128xf32>
    %105 = arith.mulf %99, %103 : vector<8x128xf32>
    %106 = arith.addf %104, %105 : vector<8x128xf32>
    %107 = math.tanh %106 : vector<8x128xf32>
    %108 = arith.mulf %101, %107 : vector<8x128xf32>
    %c4_i32 = arith.constant 4 : i32
    %109 = arith.index_cast %c4_i32 : i32 to index
    %c0_40 = arith.constant 0 : index
    %c0_41 = arith.constant 0 : index
    %110 = vector.load %arg9[%109, %c0_40, %c0_41] : memref<7x8x512xf32, #tpu.memory_space<vmem>>, vector<1x8x512xf32>
    %111 = vector.shape_cast %110 : vector<1x8x512xf32> to vector<8x512xf32>
    %cst_42 = arith.constant dense<0.000000e+00> : vector<8x512xf32>
    %112 = tpu.matmul %108, %14, %cst_42 {dimension_numbers = #tpu.dot_dimension_numbers<[1], [0], [0], [1], [0, 0, 1, 1], [], []>} : vector<8x128xf32>, vector<128x512xf32>, vector<8x512xf32> -> vector<8x512xf32>
    %113 = arith.addf %111, %112 : vector<8x512xf32>
    %114 = vector.extract_strided_slice %113 {offsets = [0, 0], sizes = [8, 384], strides = [1, 1]} : vector<8x512xf32> to vector<8x384xf32>
    %cst_43 = arith.constant 5.000000e-01 : f32
    %115 = vector.broadcast %cst_43 : f32 to vector<8x384xf32>
    %116 = arith.mulf %115, %114 : vector<8x384xf32>
    %117 = math.tanh %116 : vector<8x384xf32>
    %cst_44 = arith.constant 5.000000e-01 : f32
    %118 = vector.broadcast %cst_44 : f32 to vector<8x384xf32>
    %119 = arith.mulf %118, %117 : vector<8x384xf32>
    %cst_45 = arith.constant 5.000000e-01 : f32
    %120 = vector.broadcast %cst_45 : f32 to vector<8x384xf32>
    %121 = arith.addf %119, %120 : vector<8x384xf32>
    %122 = vector.extract_strided_slice %121 {offsets = [0, 0], sizes = [8, 128], strides = [1, 1]} : vector<8x384xf32> to vector<8x128xf32>
    %123 = vector.extract_strided_slice %121 {offsets = [0, 128], sizes = [8, 128], strides = [1, 1]} : vector<8x384xf32> to vector<8x128xf32>
    %124 = vector.extract_strided_slice %121 {offsets = [0, 256], sizes = [8, 128], strides = [1, 1]} : vector<8x384xf32> to vector<8x128xf32>
    %125 = vector.extract_strided_slice %113 {offsets = [0, 384], sizes = [8, 128], strides = [1, 1]} : vector<8x512xf32> to vector<8x128xf32>
    %126 = math.tanh %125 : vector<8x128xf32>
    %127 = arith.mulf %123, %106 : vector<8x128xf32>
    %128 = arith.mulf %122, %126 : vector<8x128xf32>
    %129 = arith.addf %127, %128 : vector<8x128xf32>
    %130 = math.tanh %129 : vector<8x128xf32>
    %131 = arith.mulf %124, %130 : vector<8x128xf32>
    %c5_i32 = arith.constant 5 : i32
    %132 = arith.index_cast %c5_i32 : i32 to index
    %c0_46 = arith.constant 0 : index
    %c0_47 = arith.constant 0 : index
    %133 = vector.load %arg9[%132, %c0_46, %c0_47] : memref<7x8x512xf32, #tpu.memory_space<vmem>>, vector<1x8x512xf32>
    %134 = vector.shape_cast %133 : vector<1x8x512xf32> to vector<8x512xf32>
    %cst_48 = arith.constant dense<0.000000e+00> : vector<8x512xf32>
    %135 = tpu.matmul %131, %14, %cst_48 {dimension_numbers = #tpu.dot_dimension_numbers<[1], [0], [0], [1], [0, 0, 1, 1], [], []>} : vector<8x128xf32>, vector<128x512xf32>, vector<8x512xf32> -> vector<8x512xf32>
    %136 = arith.addf %134, %135 : vector<8x512xf32>
    %137 = vector.extract_strided_slice %136 {offsets = [0, 0], sizes = [8, 384], strides = [1, 1]} : vector<8x512xf32> to vector<8x384xf32>
    %cst_49 = arith.constant 5.000000e-01 : f32
    %138 = vector.broadcast %cst_49 : f32 to vector<8x384xf32>
    %139 = arith.mulf %138, %137 : vector<8x384xf32>
    %140 = math.tanh %139 : vector<8x384xf32>
    %cst_50 = arith.constant 5.000000e-01 : f32
    %141 = vector.broadcast %cst_50 : f32 to vector<8x384xf32>
    %142 = arith.mulf %141, %140 : vector<8x384xf32>
    %cst_51 = arith.constant 5.000000e-01 : f32
    %143 = vector.broadcast %cst_51 : f32 to vector<8x384xf32>
    %144 = arith.addf %142, %143 : vector<8x384xf32>
    %145 = vector.extract_strided_slice %144 {offsets = [0, 0], sizes = [8, 128], strides = [1, 1]} : vector<8x384xf32> to vector<8x128xf32>
    %146 = vector.extract_strided_slice %144 {offsets = [0, 128], sizes = [8, 128], strides = [1, 1]} : vector<8x384xf32> to vector<8x128xf32>
    %147 = vector.extract_strided_slice %144 {offsets = [0, 256], sizes = [8, 128], strides = [1, 1]} : vector<8x384xf32> to vector<8x128xf32>
    %148 = vector.extract_strided_slice %136 {offsets = [0, 384], sizes = [8, 128], strides = [1, 1]} : vector<8x512xf32> to vector<8x128xf32>
    %149 = math.tanh %148 : vector<8x128xf32>
    %150 = arith.mulf %146, %129 : vector<8x128xf32>
    %151 = arith.mulf %145, %149 : vector<8x128xf32>
    %152 = arith.addf %150, %151 : vector<8x128xf32>
    %153 = math.tanh %152 : vector<8x128xf32>
    %154 = arith.mulf %147, %153 : vector<8x128xf32>
    %c6_i32 = arith.constant 6 : i32
    %155 = arith.index_cast %c6_i32 : i32 to index
    %c0_52 = arith.constant 0 : index
    %c0_53 = arith.constant 0 : index
    %156 = vector.load %arg9[%155, %c0_52, %c0_53] : memref<7x8x512xf32, #tpu.memory_space<vmem>>, vector<1x8x512xf32>
    %157 = vector.shape_cast %156 : vector<1x8x512xf32> to vector<8x512xf32>
    %cst_54 = arith.constant dense<0.000000e+00> : vector<8x512xf32>
    %158 = tpu.matmul %154, %14, %cst_54 {dimension_numbers = #tpu.dot_dimension_numbers<[1], [0], [0], [1], [0, 0, 1, 1], [], []>} : vector<8x128xf32>, vector<128x512xf32>, vector<8x512xf32> -> vector<8x512xf32>
    %159 = arith.addf %157, %158 : vector<8x512xf32>
    %160 = vector.extract_strided_slice %159 {offsets = [0, 0], sizes = [8, 384], strides = [1, 1]} : vector<8x512xf32> to vector<8x384xf32>
    %cst_55 = arith.constant 5.000000e-01 : f32
    %161 = vector.broadcast %cst_55 : f32 to vector<8x384xf32>
    %162 = arith.mulf %161, %160 : vector<8x384xf32>
    %163 = math.tanh %162 : vector<8x384xf32>
    %cst_56 = arith.constant 5.000000e-01 : f32
    %164 = vector.broadcast %cst_56 : f32 to vector<8x384xf32>
    %165 = arith.mulf %164, %163 : vector<8x384xf32>
    %cst_57 = arith.constant 5.000000e-01 : f32
    %166 = vector.broadcast %cst_57 : f32 to vector<8x384xf32>
    %167 = arith.addf %165, %166 : vector<8x384xf32>
    %168 = vector.extract_strided_slice %167 {offsets = [0, 0], sizes = [8, 128], strides = [1, 1]} : vector<8x384xf32> to vector<8x128xf32>
    %169 = vector.extract_strided_slice %167 {offsets = [0, 128], sizes = [8, 128], strides = [1, 1]} : vector<8x384xf32> to vector<8x128xf32>
    %170 = vector.extract_strided_slice %167 {offsets = [0, 256], sizes = [8, 128], strides = [1, 1]} : vector<8x384xf32> to vector<8x128xf32>
    %171 = vector.extract_strided_slice %159 {offsets = [0, 384], sizes = [8, 128], strides = [1, 1]} : vector<8x512xf32> to vector<8x128xf32>
    %172 = math.tanh %171 : vector<8x128xf32>
    %173 = arith.mulf %169, %152 : vector<8x128xf32>
    %174 = arith.mulf %168, %172 : vector<8x128xf32>
    %175 = arith.addf %173, %174 : vector<8x128xf32>
    %176 = math.tanh %175 : vector<8x128xf32>
    %177 = arith.mulf %170, %176 : vector<8x128xf32>
    %c7_i32 = arith.constant 7 : i32
    %c0_58 = arith.constant 0 : index
    %c0_59 = arith.constant 0 : index
    %178 = vector.load %arg7[%c0_58, %c0_59] : memref<8x128xf32, #tpu.memory_space<vmem>>, vector<8x128xf32>
    tpu.vector_store %arg7[%c0_58, %c0_59], %177 {strides = array<i32>} : memref<8x128xf32, #tpu.memory_space<vmem>>, vector<8x128xf32>,
    %c0_60 = arith.constant 0 : index
    %c0_61 = arith.constant 0 : index
    %179 = vector.load %arg8[%c0_60, %c0_61] : memref<8x128xf32, #tpu.memory_space<vmem>>, vector<8x128xf32>
    tpu.vector_store %arg8[%c0_60, %c0_61], %175 {strides = array<i32>} : memref<8x128xf32, #tpu.memory_space<vmem>>, vector<8x128xf32>,
    %c0_62 = arith.constant 0 : index
    %c0_63 = arith.constant 0 : index
    %180 = vector.load %arg6[%c0_62, %c0_63] : memref<8x128xf32, #tpu.memory_space<vmem>>, vector<8x128xf32>
    tpu.vector_store %arg6[%c0_62, %c0_63], %177 {strides = array<i32>} : memref<8x128xf32, #tpu.memory_space<vmem>>, vector<8x128xf32>,
    return
  }
  func.func @transform_0(%arg0: i32, %arg1: i32) -> (i32, i32, i32) {
    %c0_i32 = arith.constant 0 : i32
    %c0_i32_0 = arith.constant 0 : i32
    return %arg1, %arg0, %c0_i32 : i32, i32, i32
  }
  func.func @transform_1(%arg0: i32, %arg1: i32) -> (i32, i32) {
    %c0_i32 = arith.constant 0 : i32
    %c0_i32_0 = arith.constant 0 : i32
    %c0_i32_1 = arith.constant 0 : i32
    return %c0_i32, %c0_i32_0 : i32, i32
  }
  func.func @transform_2(%arg0: i32, %arg1: i32) -> (i32, i32) {
    %c0_i32 = arith.constant 0 : i32
    %c0_i32_0 = arith.constant 0 : i32
    %c0_i32_1 = arith.constant 0 : i32
    return %c0_i32, %c0_i32_0 : i32, i32
  }
  func.func @transform_3(%arg0: i32, %arg1: i32) -> (i32, i32) {
    %c0_i32 = arith.constant 0 : i32
    %c0_i32_0 = arith.constant 0 : i32
    %c0_i32_1 = arith.constant 0 : i32
    return %c0_i32, %c0_i32_0 : i32, i32
  }
  func.func @transform_4(%arg0: i32, %arg1: i32) -> (i32, i32) {
    %c0_i32 = arith.constant 0 : i32
    %c0_i32_0 = arith.constant 0 : i32
    return %arg0, %c0_i32 : i32, i32
  }
}

</mosaic_0001>

<llo_original>
// kernel: tpu_custom_call.1
$region0: #{tpu_custom_call.1}
  #allocation0 [shape = 'u32[]', space=smem, size = 0x4, offset = 0x4, fixed_abs, tag = 'smem constant byte address 0x4 - core index']
  #allocation1 [shape = 'u32[72,128]{1,0:T(1,128)}', space=vmem, size = 0x9000, scoped, tag = 'internal scratch']
  #allocation2 [shape = 'f32[8,128]{1,0:T(8,128)}', space=vmem, size = 0x1000, scoped, tag = 'scratch operand']
  #allocation3 [shape = 'f32[8,128]{1,0:T(8,128)}', space=vmem, size = 0x1000, scoped, tag = 'scratch operand']
  #allocation4 [shape = 'f32[7,8,512]{2,1,0:T(8,128)}', space=vmem, size = 0x1c000, scoped, tag = 'scratch operand']
  %s0 = inlined_call_operand.vmem [shape: f32[7,8,1], index: 0, kind: input, shape index: {}]
  %s1 = inlined_call_operand.vmem [shape: f32[1,512], index: 1, kind: input, shape index: {}]
  %s2 = inlined_call_operand.hbm [shape: f32[128,512], index: 2, kind: input, shape index: {}]
  %s3 = inlined_call_operand.vmem [shape: f32[1,512], index: 3, kind: input, shape index: {}]
  %s4 = inlined_call_operand.hbm [shape: f32[8,128], index: 4, kind: output, shape index: {}]
  %s5 = sld [smem:[#allocation0]]
  $region34: #{tpu_custom_call.1} parent=0
    _
  %s7 = ssub.s32 1, %s5
  %s8 = scalar_select 0, %s7, %s5
  $region1: #{tpu_custom_call.1} parent=0
    #allocation5 [shape = 'u8[262144]{0}', space=vmem, size = 0x40000, scoped, tag = 'input window, operand 2, single buffered']
    #allocation6 [shape = 's32[1]{0}', space=sflag, size = 0x4, scoped, tag = 'scoped memory for tpu_custom_call.1']
    #allocation7 [shape = 's32[1]{0}', space=sflag, size = 0x4, scoped, tag = 'scoped memory for tpu_custom_call.1']
    #allocation8 [shape = 'u8[4096]{0}', space=vmem, size = 0x1000, scoped, tag = 'output window, operand 0, single buffered']
    %9 = vsyncpa [#allocation6], 0
    %10 = vsyncpa [#allocation7], 0
    // Predicated region
    $region2: #{tpu_custom_call.1} parent=1 // pred_check
      _
    $region3: #{tpu_custom_call.1} parent=1 // pred_check_branch
      %12 = sbr.rel (0) target = $region5
    $region4: #{tpu_custom_call.1} parent=1 // pred_region
      _
    $region5: #{tpu_custom_call.1} parent=1 // pred_fallthru
      _
    // Predicated region
    $region6: #{tpu_custom_call.1} parent=1 // pred_check
      _
    $region7: #{tpu_custom_call.1} parent=1 // pred_check_branch
      %14 = sbr.rel (0) target = $region9
    $region8: #{tpu_custom_call.1} parent=1 // pred_region
      _
    $region9: #{tpu_custom_call.1} parent=1 // pred_fallthru
      _
    // Predicated region
    $region10: #{tpu_custom_call.1} parent=1 // pred_check
      _
    $region11: #{tpu_custom_call.1} parent=1 // pred_check_branch
      %16 = sbr.rel (0) target = $region13
    $region12: #{tpu_custom_call.1} parent=1 // pred_region
      %18 = vsyncadd [#allocation6], 0
      %s19 = sshll.u32 %s2, 4
      %s20 = int_to_ptr.hbm [resolvable:$true] %s19
      %s21 = sshll.u32 [#allocation5], 4
      %s22 = int_to_ptr.vmem [resolvable:$true] %s21
      %27 = dma.hbm_to_vmem [thread:$0]  %s20, 8192, %s22, [#allocation6], 512, 512, 32
    $region13: #{tpu_custom_call.1} parent=1 // pred_fallthru
      _
    // Predicated region
    $region14: #{tpu_custom_call.1} parent=1 // pred_check
      _
    $region15: #{tpu_custom_call.1} parent=1 // pred_check_branch
      %29 = sbr.rel (0) target = $region17
    $region16: #{tpu_custom_call.1} parent=1 // pred_region
      _
    $region17: #{tpu_custom_call.1} parent=1 // pred_fallthru
      _
    // Predicated region
    $region18: #{tpu_custom_call.1} parent=1 // pred_check
      _
    $region19: #{tpu_custom_call.1} parent=1 // pred_check_branch
      %31 = sbr.rel (0) target = $region21
    $region20: #{tpu_custom_call.1} parent=1 // pred_region
      %33 = dma.done [#allocation6], 8192
    $region21: #{tpu_custom_call.1} parent=1 // pred_fallthru
      _
    %p34 = scmp.eq.s32.totalorder 0, 0
    // Predicated region
    $region22: #{tpu_custom_call.1} parent=1 // pred_check
      %p35 = pneg %p34
    $region23: #{tpu_custom_call.1} parent=1 // pred_check_branch
      %37 = sbr.rel (%p35) target = $region25
    $region24: #{tpu_custom_call.1} parent=1 // pred_region
      %38 = vst [vmem:[#allocation2] sm:$0xff] 0.0
      %39 = vst [vmem:[#allocation3] sm:$0xff] 0.0
    $region25: #{tpu_custom_call.1} parent=1 // pred_fallthru
      _
    %v40 = vld [vmem:[%s3] sm:$0xf]
    %v41 = vld [vmem:[%s1] sm:$0xf]
    %v42 = vld [vmem:[%s0] sm:$0xff]
    %v43 = vld [vmem:[%s0 + $0x8] sm:$0xff]
    %v44 = vld [vmem:[%s0 + $0x10] sm:$0xff]
    %v45 = vld [vmem:[%s0 + $0x18] sm:$0xff]
    %v46 = vld [vmem:[%s0 + $0x20] sm:$0xff]
    %v47 = vld [vmem:[%s0 + $0x28] sm:$0xff]
    %v48 = vld [vmem:[%s0 + $0x30] sm:$0xff]
    %50 = vset.pattern.permute.xlu0 0
    %51 = vperm.xlu0 %50, %v42
    %v52 = vpop.permute.xlu0 %51
    %55 = vset.pattern.permute.xlu0 0
    %56 = vperm.xlu0 %55, %v43
    %v57 = vpop.permute.xlu0 %56
    %60 = vset.pattern.permute.xlu0 0
    %61 = vperm.xlu0 %60, %v44
    %v62 = vpop.permute.xlu0 %61
    %65 = vset.pattern.permute.xlu0 0
    %66 = vperm.xlu0 %65, %v45
    %v67 = vpop.permute.xlu0 %66
    %70 = vset.pattern.permute.xlu0 0
    %71 = vperm.xlu0 %70, %v46
    %v72 = vpop.permute.xlu0 %71
    %75 = vset.pattern.permute.xlu0 0
    %76 = vperm.xlu0 %75, %v47
    %v77 = vpop.permute.xlu0 %76
    %80 = vset.pattern.permute.xlu0 0
    %81 = vperm.xlu0 %80, %v48
    %v82 = vpop.permute.xlu0 %81
    %v85 = vperm.slane %v41, 0
    %v86 = vperm.slane %v41, 1
    %v87 = vperm.slane %v41, 2
    %v88 = vperm.slane %v41, 3
    %v93 = vmul.f32 %v52, %v85
    %v94 = vmul.f32 %v52, %v86
    %v95 = vmul.f32 %v52, %v87
    %v96 = vmul.f32 %v52, %v88
    %v97 = vmul.f32 %v57, %v85
    %v98 = vmul.f32 %v57, %v86
    %v99 = vmul.f32 %v57, %v87
    %v100 = vmul.f32 %v57, %v88
    %v101 = vmul.f32 %v62, %v85
    %v102 = vmul.f32 %v62, %v86
    %v103 = vmul.f32 %v62, %v87
    %v104 = vmul.f32 %v62, %v88
    %v105 = vmul.f32 %v67, %v85
    %v106 = vmul.f32 %v67, %v86
    %v107 = vmul.f32 %v67, %v87
    %v108 = vmul.f32 %v67, %v88
    %v109 = vmul.f32 %v72, %v85
    %v110 = vmul.f32 %v72, %v86
    %v111 = vmul.f32 %v72, %v87
    %v112 = vmul.f32 %v72, %v88
    %v113 = vmul.f32 %v77, %v85
    %v114 = vmul.f32 %v77, %v86
    %v115 = vmul.f32 %v77, %v87
    %v116 = vmul.f32 %v77, %v88
    %v117 = vmul.f32 %v82, %v85
    %v118 = vmul.f32 %v82, %v86
    %v119 = vmul.f32 %v82, %v87
    %v120 = vmul.f32 %v82, %v88
    %v122 = vperm.slane %v40, 0
    %v123 = vperm.slane %v40, 1
    %v124 = vperm.slane %v40, 2
    %v125 = vperm.slane %v40, 3
    %v130 = vadd.f32 %v93, %v122
    %v131 = vadd.f32 %v94, %v123
    %v132 = vadd.f32 %v95, %v124
    %v133 = vadd.f32 %v96, %v125
    %v134 = vadd.f32 %v97, %v122
    %v135 = vadd.f32 %v98, %v123
    %v136 = vadd.f32 %v99, %v124
    %v137 = vadd.f32 %v100, %v125
    %v138 = vadd.f32 %v101, %v122
    %v139 = vadd.f32 %v102, %v123
    %v140 = vadd.f32 %v103, %v124
    %v141 = vadd.f32 %v104, %v125
    %v142 = vadd.f32 %v105, %v122
    %v143 = vadd.f32 %v106, %v123
    %v144 = vadd.f32 %v107, %v124
    %v145 = vadd.f32 %v108, %v125
    %v146 = vadd.f32 %v109, %v122
    %v147 = vadd.f32 %v110, %v123
    %v148 = vadd.f32 %v111, %v124
    %v149 = vadd.f32 %v112, %v125
    %v150 = vadd.f32 %v113, %v122
    %v151 = vadd.f32 %v114, %v123
    %v152 = vadd.f32 %v115, %v124
    %v153 = vadd.f32 %v116, %v125
    %v154 = vadd.f32 %v117, %v122
    %v155 = vadd.f32 %v118, %v123
    %v156 = vadd.f32 %v119, %v124
    %v157 = vadd.f32 %v120, %v125
    %158 = vst [vmem:[#allocation4] sm:$0xff] %v130
    %159 = vst [vmem:[#allocation4 + $0x8] sm:$0xff] %v131
    %160 = vst [vmem:[#allocation4 + $0x10] sm:$0xff] %v132
    %161 = vst [vmem:[#allocation4 + $0x18] sm:$0xff] %v133
    %162 = vst [vmem:[#allocation4 + $0x20] sm:$0xff] %v134
    %163 = vst [vmem:[#allocation4 + $0x28] sm:$0xff] %v135
    %164 = vst [vmem:[#allocation4 + $0x30] sm:$0xff] %v136
    %165 = vst [vmem:[#allocation4 + $0x38] sm:$0xff] %v137
    %166 = vst [vmem:[#allocation4 + $0x40] sm:$0xff] %v138
    %167 = vst [vmem:[#allocation4 + $0x48] sm:$0xff] %v139
    %168 = vst [vmem:[#allocation4 + $0x50] sm:$0xff] %v140
    %169 = vst [vmem:[#allocation4 + $0x58] sm:$0xff] %v141
    %170 = vst [vmem:[#allocation4 + $0x60] sm:$0xff] %v142
    %171 = vst [vmem:[#allocation4 + $0x68] sm:$0xff] %v143
    %172 = vst [vmem:[#allocation4 + $0x70] sm:$0xff] %v144
    %173 = vst [vmem:[#allocation4 + $0x78] sm:$0xff] %v145
    %174 = vst [vmem:[#allocation4 + $0x80] sm:$0xff] %v146
    %175 = vst [vmem:[#allocation4 + $0x88] sm:$0xff] %v147
    %176 = vst [vmem:[#allocation4 + $0x90] sm:$0xff] %v148
    %177 = vst [vmem:[#allocation4 + $0x98] sm:$0xff] %v149
    %178 = vst [vmem:[#allocation4 + $0xa0] sm:$0xff] %v150
    %179 = vst [vmem:[#allocation4 + $0xa8] sm:$0xff] %v151
    %180 = vst [vmem:[#allocation4 + $0xb0] sm:$0xff] %v152
    %181 = vst [vmem:[#allocation4 + $0xb8] sm:$0xff] %v153
    %182 = vst [vmem:[#allocation4 + $0xc0] sm:$0xff] %v154
    %183 = vst [vmem:[#allocation4 + $0xc8] sm:$0xff] %v155
    %184 = vst [vmem:[#allocation4 + $0xd0] sm:$0xff] %v156
    %185 = vst [vmem:[#allocation4 + $0xd8] sm:$0xff] %v157
    %v186 = vld [vmem:[#allocation5] sm:$0xff]
    %v187 = vld [vmem:[#allocation5 + $0x8] sm:$0xff]
    %v188 = vld [vmem:[#allocation5 + $0x10] sm:$0xff]
    %v189 = vld [vmem:[#allocation5 + $0x18] sm:$0xff]
    %v190 = vld [vmem:[#allocation5 + $0x20] sm:$0xff]
    %v191 = vld [vmem:[#allocation5 + $0x28] sm:$0xff]
    %v192 = vld [vmem:[#allocation5 + $0x30] sm:$0xff]
    %v193 = vld [vmem:[#allocation5 + $0x38] sm:$0xff]
    %v194 = vld [vmem:[#allocation5 + $0x40] sm:$0xff]
    %v195 = vld [vmem:[#allocation5 + $0x48] sm:$0xff]
    %v196 = vld [vmem:[#allocation5 + $0x50] sm:$0xff]
    %v197 = vld [vmem:[#allocation5 + $0x58] sm:$0xff]
    %v198 = vld [vmem:[#allocation5 + $0x60] sm:$0xff]
    %v199 = vld [vmem:[#allocation5 + $0x68] sm:$0xff]
    %v200 = vld [vmem:[#allocation5 + $0x70] sm:$0xff]
    %v201 = vld [vmem:[#allocation5 + $0x78] sm:$0xff]
    %v202 = vld [vmem:[#allocation5 + $0x80] sm:$0xff]
    %v203 = vld [vmem:[#allocation5 + $0x88] sm:$0xff]
    %v204 = vld [vmem:[#allocation5 + $0x90] sm:$0xff]
    %v205 = vld [vmem:[#allocation5 + $0x98] sm:$0xff]
    %v206 = vld [vmem:[#allocation5 + $0xa0] sm:$0xff]
    %v207 = vld [vmem:[#allocation5 + $0xa8] sm:$0xff]
    %v208 = vld [vmem:[#allocation5 + $0xb0] sm:$0xff]
    %v209 = vld [vmem:[#allocation5 + $0xb8] sm:$0xff]
    %v210 = vld [vmem:[#allocation5 + $0xc0] sm:$0xff]
    %v211 = vld [vmem:[#allocation5 + $0xc8] sm:$0xff]
    %v212 = vld [vmem:[#allocation5 + $0xd0] sm:$0xff]
    %v213 = vld [vmem:[#allocation5 + $0xd8] sm:$0xff]
    %v214 = vld [vmem:[#allocation5 + $0xe0] sm:$0xff]
    %v215 = vld [vmem:[#allocation5 + $0xe8] sm:$0xff]
    %v216 = vld [vmem:[#allocation5 + $0xf0] sm:$0xff]
    %v217 = vld [vmem:[#allocation5 + $0xf8] sm:$0xff]
    %v218 = vld [vmem:[#allocation5 + $0x100] sm:$0xff]
    %v219 = vld [vmem:[#allocation5 + $0x108] sm:$0xff]
    %v220 = vld [vmem:[#allocation5 + $0x110] sm:$0xff]
    %v221 = vld [vmem:[#allocation5 + $0x118] sm:$0xff]
    %v222 = vld [vmem:[#allocation5 + $0x120] sm:$0xff]
    %v223 = vld [vmem:[#allocation5 + $0x128] sm:$0xff]
    %v224 = vld [vmem:[#allocation5 + $0x130] sm:$0xff]
    %v225 = vld [vmem:[#allocation5 + $0x138] sm:$0xff]
    %v226 = vld [vmem:[#allocation5 + $0x140] sm:$0xff]
    %v227 = vld [vmem:[#allocation5 + $0x148] sm:$0xff]
    %v228 = vld [vmem:[#allocation5 + $0x150] sm:$0xff]
    %v229 = vld [vmem:[#allocation5 + $0x158] sm:$0xff]
    %v230 = vld [vmem:[#allocation5 + $0x160] sm:$0xff]
    %v231 = vld [vmem:[#allocation5 + $0x168] sm:$0xff]
    %v232 = vld [vmem:[#allocation5 + $0x170] sm:$0xff]
    %v233 = vld [vmem:[#allocation5 + $0x178] sm:$0xff]
    %v234 = vld [vmem:[#allocation5 + $0x180] sm:$0xff]
    %v235 = vld [vmem:[#allocation5 + $0x188] sm:$0xff]
    %v236 = vld [vmem:[#allocation5 + $0x190] sm:$0xff]
    %v237 = vld [vmem:[#allocation5 + $0x198] sm:$0xff]
    %v238 = vld [vmem:[#allocation5 + $0x1a0] sm:$0xff]
    %v239 = vld [vmem:[#allocation5 + $0x1a8] sm:$0xff]
    %v240 = vld [vmem:[#allocation5 + $0x1b0] sm:$0xff]
    %v241 = vld [vmem:[#allocation5 + $0x1b8] sm:$0xff]
    %v242 = vld [vmem:[#allocation5 + $0x1c0] sm:$0xff]
    %v243 = vld [vmem:[#allocation5 + $0x1c8] sm:$0xff]
    %v244 = vld [vmem:[#allocation5 + $0x1d0] sm:$0xff]
    %v245 = vld [vmem:[#allocation5 + $0x1d8] sm:$0xff]
    %v246 = vld [vmem:[#allocation5 + $0x1e0] sm:$0xff]
    %v247 = vld [vmem:[#allocation5 + $0x1e8] sm:$0xff]
    %v248 = vld [vmem:[#allocation5 + $0x1f0] sm:$0xff]
    %v249 = vld [vmem:[#allocation5 + $0x1f8] sm:$0xff]
    %v250 = vld [vmem:[#allocation2] sm:$0xff]
    %v251 = vld [vmem:[#allocation3] sm:$0xff]
    %v252 = vld [vmem:[#allocation4] sm:$0xff]
    %v253 = vld [vmem:[#allocation4 + $0x8] sm:$0xff]
    %v254 = vld [vmem:[#allocation4 + $0x10] sm:$0xff]
    %v255 = vld [vmem:[#allocation4 + $0x18] sm:$0xff]
    %256 = vmatpush.msra.mxu0 %v246
    %257 = vmatpush.msra.mxu0 %v242
    %258 = vmatpush.msra.mxu0 %v238
    %259 = vmatpush.msra.mxu0 %v234
    %260 = vmatpush.msra.mxu0 %v230
    %261 = vmatpush.msra.mxu0 %v226
    %262 = vmatpush.msra.mxu0 %v222
    %263 = vmatpush.msra.mxu0 %v218
    %264 = vmatpush.msra.mxu0 %v214
    %265 = vmatpush.msra.mxu0 %v210
    %266 = vmatpush.msra.mxu0 %v206
    %267 = vmatpush.msra.mxu0 %v202
    %268 = vmatpush.msra.mxu0 %v198
    %269 = vmatpush.msra.mxu0 %v194
    %270 = vmatpush.msra.mxu0 %v190
    %271 = vmatpush.msra.mxu0 %v186
    %272 = vmatmul.f32.gmra.mxu0 %v250
    %v273 = vpop.f32.mrf.mxu0
    %v274 = vadd.f32 0.0, %v273
    %275 = vdwg.mxu0
    %276 = vmatpush.msra.mxu0 %v247
    %277 = vmatpush.msra.mxu0 %v243
    %278 = vmatpush.msra.mxu0 %v239
    %279 = vmatpush.msra.mxu0 %v235
    %280 = vmatpush.msra.mxu0 %v231
    %281 = vmatpush.msra.mxu0 %v227
    %282 = vmatpush.msra.mxu0 %v223
    %283 = vmatpush.msra.mxu0 %v219
    %284 = vmatpush.msra.mxu0 %v215
    %285 = vmatpush.msra.mxu0 %v211
    %286 = vmatpush.msra.mxu0 %v207
    %287 = vmatpush.msra.mxu0 %v203
    %288 = vmatpush.msra.mxu0 %v199
    %289 = vmatpush.msra.mxu0 %v195
    %290 = vmatpush.msra.mxu0 %v191
    %291 = vmatpush.msra.mxu0 %v187
    %292 = vmatmul.f32.gmra.mxu0 %v250
    %v293 = vpop.f32.mrf.mxu0
    %v294 = vadd.f32 0.0, %v293
    %295 = vdwg.mxu0
    %296 = vmatpush.msra.mxu0 %v248
    %297 = vmatpush.msra.mxu0 %v244
    %298 = vmatpush.msra.mxu0 %v240
    %299 = vmatpush.msra.mxu0 %v236
    %300 = vmatpush.msra.mxu0 %v232
    %301 = vmatpush.msra.mxu0 %v228
    %302 = vmatpush.msra.mxu0 %v224
    %303 = vmatpush.msra.mxu0 %v220
    %304 = vmatpush.msra.mxu0 %v216
    %305 = vmatpush.msra.mxu0 %v212
    %306 = vmatpush.msra.mxu0 %v208
    %307 = vmatpush.msra.mxu0 %v204
    %308 = vmatpush.msra.mxu0 %v200
    %309 = vmatpush.msra.mxu0 %v196
    %310 = vmatpush.msra.mxu0 %v192
    %311 = vmatpush.msra.mxu0 %v188
    %312 = vmatmul.f32.gmra.mxu0 %v250
    %v313 = vpop.f32.mrf.mxu0
    %v314 = vadd.f32 0.0, %v313
    %315 = vdwg.mxu0
    %316 = vmatpush.msra.mxu0 %v249
    %317 = vmatpush.msra.mxu0 %v245
    %318 = vmatpush.msra.mxu0 %v241
    %319 = vmatpush.msra.mxu0 %v237
    %320 = vmatpush.msra.mxu0 %v233
    %321 = vmatpush.msra.mxu0 %v229
    %322 = vmatpush.msra.mxu0 %v225
    %323 = vmatpush.msra.mxu0 %v221
    %324 = vmatpush.msra.mxu0 %v217
    %325 = vmatpush.msra.mxu0 %v213
    %326 = vmatpush.msra.mxu0 %v209
    %327 = vmatpush.msra.mxu0 %v205
    %328 = vmatpush.msra.mxu0 %v201
    %329 = vmatpush.msra.mxu0 %v197
    %330 = vmatpush.msra.mxu0 %v193
    %331 = vmatpush.msra.mxu0 %v189
    %332 = vmatmul.f32.gmra.mxu0 %v250
    %v333 = vpop.f32.mrf.mxu0
    %v334 = vadd.f32 0.0, %v333
    %335 = vdwg.mxu0
    %v336 = vadd.f32 %v252, %v274
    %v337 = vadd.f32 %v253, %v294
    %v338 = vadd.f32 %v254, %v314
    %v339 = vadd.f32 %v255, %v334
    %v340 = vmul.f32 %v336, 0.5
    %v341 = vmul.f32 %v337, 0.5
    %v342 = vmul.f32 %v338, 0.5
    %v343 = vtanh.pop %v340
    %v344 = vtanh.pop %v341
    %v345 = vtanh.pop %v342
    %v346 = vmul.f32 %v343, 0.5
    %v347 = vmul.f32 %v344, 0.5
    %v348 = vmul.f32 %v345, 0.5
    %v349 = vadd.f32 %v346, 0.5
    %v350 = vadd.f32 %v347, 0.5
    %v351 = vadd.f32 %v348, 0.5
    %v352 = vtanh.pop %v339
    %v353 = vmul.f32 %v350, %v251
    %v354 = vmul.f32 %v349, %v352
    %v355 = vadd.f32 %v353, %v354
    %v356 = vtanh.pop %v355
    %v357 = vmul.f32 %v351, %v356
    %s358 = scalar_lea.vmem [#allocation4], 32
    %v359 = vld [vmem:[%s358] sm:$0xff]
    %v360 = vld [vmem:[%s358 + $0x8] sm:$0xff]
    %v361 = vld [vmem:[%s358 + $0x10] sm:$0xff]
    %v362 = vld [vmem:[%s358 + $0x18] sm:$0xff]
    %363 = vmatpush.msra.mxu0 %v246
    %364 = vmatpush.msra.mxu0 %v242
    %365 = vmatpush.msra.mxu0 %v238
    %366 = vmatpush.msra.mxu0 %v234
    %367 = vmatpush.msra.mxu0 %v230
    %368 = vmatpush.msra.mxu0 %v226
    %369 = vmatpush.msra.mxu0 %v222
    %370 = vmatpush.msra.mxu0 %v218
    %371 = vmatpush.msra.mxu0 %v214
    %372 = vmatpush.msra.mxu0 %v210
    %373 = vmatpush.msra.mxu0 %v206
    %374 = vmatpush.msra.mxu0 %v202
    %375 = vmatpush.msra.mxu0 %v198
    %376 = vmatpush.msra.mxu0 %v194
    %377 = vmatpush.msra.mxu0 %v190
    %378 = vmatpush.msra.mxu0 %v186
    %379 = vmatmul.f32.gmra.mxu0 %v357
    %v380 = vpop.f32.mrf.mxu0
    %v381 = vadd.f32 0.0, %v380
    %382 = vdwg.mxu0
    %383 = vmatpush.msra.mxu0 %v247
    %384 = vmatpush.msra.mxu0 %v243
    %385 = vmatpush.msra.mxu0 %v239
    %386 = vmatpush.msra.mxu0 %v235
    %387 = vmatpush.msra.mxu0 %v231
    %388 = vmatpush.msra.mxu0 %v227
    %389 = vmatpush.msra.mxu0 %v223
    %390 = vmatpush.msra.mxu0 %v219
    %391 = vmatpush.msra.mxu0 %v215
    %392 = vmatpush.msra.mxu0 %v211
    %393 = vmatpush.msra.mxu0 %v207
    %394 = vmatpush.msra.mxu0 %v203
    %395 = vmatpush.msra.mxu0 %v199
    %396 = vmatpush.msra.mxu0 %v195
    %397 = vmatpush.msra.mxu0 %v191
    %398 = vmatpush.msra.mxu0 %v187
    %399 = vmatmul.f32.gmra.mxu0 %v357
    %v400 = vpop.f32.mrf.mxu0
    %v401 = vadd.f32 0.0, %v400
    %402 = vdwg.mxu0
    %403 = vmatpush.msra.mxu0 %v248
    %404 = vmatpush.msra.mxu0 %v244
    %405 = vmatpush.msra.mxu0 %v240
    %406 = vmatpush.msra.mxu0 %v236
    %407 = vmatpush.msra.mxu0 %v232
    %408 = vmatpush.msra.mxu0 %v228
    %409 = vmatpush.msra.mxu0 %v224
    %410 = vmatpush.msra.mxu0 %v220
    %411 = vmatpush.msra.mxu0 %v216
    %412 = vmatpush.msra.mxu0 %v212
    %413 = vmatpush.msra.mxu0 %v208
    %414 = vmatpush.msra.mxu0 %v204
    %415 = vmatpush.msra.mxu0 %v200
    %416 = vmatpush.msra.mxu0 %v196
    %417 = vmatpush.msra.mxu0 %v192
    %418 = vmatpush.msra.mxu0 %v188
    %419 = vmatmul.f32.gmra.mxu0 %v357
    %v420 = vpop.f32.mrf.mxu0
    %v421 = vadd.f32 0.0, %v420
    %422 = vdwg.mxu0
    %423 = vmatpush.msra.mxu0 %v249
    %424 = vmatpush.msra.mxu0 %v245
    %425 = vmatpush.msra.mxu0 %v241
    %426 = vmatpush.msra.mxu0 %v237
    %427 = vmatpush.msra.mxu0 %v233
    %428 = vmatpush.msra.mxu0 %v229
    %429 = vmatpush.msra.mxu0 %v225
    %430 = vmatpush.msra.mxu0 %v221
    %431 = vmatpush.msra.mxu0 %v217
    %432 = vmatpush.msra.mxu0 %v213
    %433 = vmatpush.msra.mxu0 %v209
    %434 = vmatpush.msra.mxu0 %v205
    %435 = vmatpush.msra.mxu0 %v201
    %436 = vmatpush.msra.mxu0 %v197
    %437 = vmatpush.msra.mxu0 %v193
    %438 = vmatpush.msra.mxu0 %v189
    %439 = vmatmul.f32.gmra.mxu0 %v357
    %v440 = vpop.f32.mrf.mxu0
    %v441 = vadd.f32 0.0, %v440
    %442 = vdwg.mxu0
    %v443 = vadd.f32 %v359, %v381
    %v444 = vadd.f32 %v360, %v401
    %v445 = vadd.f32 %v361, %v421
    %v446 = vadd.f32 %v362, %v441
    %v447 = vmul.f32 %v443, 0.5
    %v448 = vmul.f32 %v444, 0.5
    %v449 = vmul.f32 %v445, 0.5
    %v450 = vtanh.pop %v447
    %v451 = vtanh.pop %v448
    %v452 = vtanh.pop %v449
    %v453 = vmul.f32 %v450, 0.5
    %v454 = vmul.f32 %v451, 0.5
    %v455 = vmul.f32 %v452, 0.5
    %v456 = vadd.f32 %v453, 0.5
    %v457 = vadd.f32 %v454, 0.5
    %v458 = vadd.f32 %v455, 0.5
    %v459 = vtanh.pop %v446
    %v460 = vmul.f32 %v457, %v355
    %v461 = vmul.f32 %v456, %v459
    %v462 = vadd.f32 %v460, %v461
    %v463 = vtanh.pop %v462
    %v464 = vmul.f32 %v458, %v463
    %s465 = scalar_lea.vmem [#allocation4], 64
    %v466 = vld [vmem:[%s465] sm:$0xff]
    %v467 = vld [vmem:[%s465 + $0x8] sm:$0xff]
    %v468 = vld [vmem:[%s465 + $0x10] sm:$0xff]
    %v469 = vld [vmem:[%s465 + $0x18] sm:$0xff]
    %470 = vmatpush.msra.mxu0 %v246
    %471 = vmatpush.msra.mxu0 %v242
    %472 = vmatpush.msra.mxu0 %v238
    %473 = vmatpush.msra.mxu0 %v234
    %474 = vmatpush.msra.mxu0 %v230
    %475 = vmatpush.msra.mxu0 %v226
    %476 = vmatpush.msra.mxu0 %v222
    %477 = vmatpush.msra.mxu0 %v218
    %478 = vmatpush.msra.mxu0 %v214
    %479 = vmatpush.msra.mxu0 %v210
    %480 = vmatpush.msra.mxu0 %v206
    %481 = vmatpush.msra.mxu0 %v202
    %482 = vmatpush.msra.mxu0 %v198
    %483 = vmatpush.msra.mxu0 %v194
    %484 = vmatpush.msra.mxu0 %v190
    %485 = vmatpush.msra.mxu0 %v186
    %486 = vmatmul.f32.gmra.mxu0 %v464
    %v487 = vpop.f32.mrf.mxu0
    %v488 = vadd.f32 0.0, %v487
    %489 = vdwg.mxu0
    %490 = vmatpush.msra.mxu0 %v247
    %491 = vmatpush.msra.mxu0 %v243
    %492 = vmatpush.msra.mxu0 %v239
    %493 = vmatpush.msra.mxu0 %v235
    %494 = vmatpush.msra.mxu0 %v231
    %495 = vmatpush.msra.mxu0 %v227
    %496 = vmatpush.msra.mxu0 %v223
    %497 = vmatpush.msra.mxu0 %v219
    %498 = vmatpush.msra.mxu0 %v215
    %499 = vmatpush.msra.mxu0 %v211
    %500 = vmatpush.msra.mxu0 %v207
    %501 = vmatpush.msra.mxu0 %v203
    %502 = vmatpush.msra.mxu0 %v199
    %503 = vmatpush.msra.mxu0 %v195
    %504 = vmatpush.msra.mxu0 %v191
    %505 = vmatpush.msra.mxu0 %v187
    %506 = vmatmul.f32.gmra.mxu0 %v464
    %v507 = vpop.f32.mrf.mxu0
    %v508 = vadd.f32 0.0, %v507
    %509 = vdwg.mxu0
    %510 = vmatpush.msra.mxu0 %v248
    %511 = vmatpush.msra.mxu0 %v244
    %512 = vmatpush.msra.mxu0 %v240
    %513 = vmatpush.msra.mxu0 %v236
    %514 = vmatpush.msra.mxu0 %v232
    %515 = vmatpush.msra.mxu0 %v228
    %516 = vmatpush.msra.mxu0 %v224
    %517 = vmatpush.msra.mxu0 %v220
    %518 = vmatpush.msra.mxu0 %v216
    %519 = vmatpush.msra.mxu0 %v212
    %520 = vmatpush.msra.mxu0 %v208
    %521 = vmatpush.msra.mxu0 %v204
    %522 = vmatpush.msra.mxu0 %v200
    %523 = vmatpush.msra.mxu0 %v196
    %524 = vmatpush.msra.mxu0 %v192
    %525 = vmatpush.msra.mxu0 %v188
    %526 = vmatmul.f32.gmra.mxu0 %v464
    %v527 = vpop.f32.mrf.mxu0
    %v528 = vadd.f32 0.0, %v527
    %529 = vdwg.mxu0
    %530 = vmatpush.msra.mxu0 %v249
    %531 = vmatpush.msra.mxu0 %v245
    %532 = vmatpush.msra.mxu0 %v241
    %533 = vmatpush.msra.mxu0 %v237
    %534 = vmatpush.msra.mxu0 %v233
    %535 = vmatpush.msra.mxu0 %v229
    %536 = vmatpush.msra.mxu0 %v225
    %537 = vmatpush.msra.mxu0 %v221
    %538 = vmatpush.msra.mxu0 %v217
    %539 = vmatpush.msra.mxu0 %v213
    %540 = vmatpush.msra.mxu0 %v209
    %541 = vmatpush.msra.mxu0 %v205
    %542 = vmatpush.msra.mxu0 %v201
    %543 = vmatpush.msra.mxu0 %v197
    %544 = vmatpush.msra.mxu0 %v193
    %545 = vmatpush.msra.mxu0 %v189
    %546 = vmatmul.f32.gmra.mxu0 %v464
    %v547 = vpop.f32.mrf.mxu0
    %v548 = vadd.f32 0.0, %v547
    %549 = vdwg.mxu0
    %v550 = vadd.f32 %v466, %v488
    %v551 = vadd.f32 %v467, %v508
    %v552 = vadd.f32 %v468, %v528
    %v553 = vadd.f32 %v469, %v548
    %v554 = vmul.f32 %v550, 0.5
    %v555 = vmul.f32 %v551, 0.5
    %v556 = vmul.f32 %v552, 0.5
    %v557 = vtanh.pop %v554
    %v558 = vtanh.pop %v555
    %v559 = vtanh.pop %v556
    %v560 = vmul.f32 %v557, 0.5
    %v561 = vmul.f32 %v558, 0.5
    %v562 = vmul.f32 %v559, 0.5
    %v563 = vadd.f32 %v560, 0.5
    %v564 = vadd.f32 %v561, 0.5
    %v565 = vadd.f32 %v562, 0.5
    %v566 = vtanh.pop %v553
    %v567 = vmul.f32 %v564, %v462
    %v568 = vmul.f32 %v563, %v566
    %v569 = vadd.f32 %v567, %v568
    %v570 = vtanh.pop %v569
    %v571 = vmul.f32 %v565, %v570
    %s572 = scalar_lea.vmem [#allocation4], 96
    %v573 = vld [vmem:[%s572] sm:$0xff]
    %v574 = vld [vmem:[%s572 + $0x8] sm:$0xff]
    %v575 = vld [vmem:[%s572 + $0x10] sm:$0xff]
    %v576 = vld [vmem:[%s572 + $0x18] sm:$0xff]
    %577 = vmatpush.msra.mxu0 %v246
    %578 = vmatpush.msra.mxu0 %v242
    %579 = vmatpush.msra.mxu0 %v238
    %580 = vmatpush.msra.mxu0 %v234
    %581 = vmatpush.msra.mxu0 %v230
    %582 = vmatpush.msra.mxu0 %v226
    %583 = vmatpush.msra.mxu0 %v222
    %584 = vmatpush.msra.mxu0 %v218
    %585 = vmatpush.msra.mxu0 %v214
    %586 = vmatpush.msra.mxu0 %v210
    %587 = vmatpush.msra.mxu0 %v206
    %588 = vmatpush.msra.mxu0 %v202
    %589 = vmatpush.msra.mxu0 %v198
    %590 = vmatpush.msra.mxu0 %v194
    %591 = vmatpush.msra.mxu0 %v190
    %592 = vmatpush.msra.mxu0 %v186
    %593 = vmatmul.f32.gmra.mxu0 %v571
    %v594 = vpop.f32.mrf.mxu0
    %v595 = vadd.f32 0.0, %v594
    %596 = vdwg.mxu0
    %597 = vmatpush.msra.mxu0 %v247
    %598 = vmatpush.msra.mxu0 %v243
    %599 = vmatpush.msra.mxu0 %v239
    %600 = vmatpush.msra.mxu0 %v235
    %601 = vmatpush.msra.mxu0 %v231
    %602 = vmatpush.msra.mxu0 %v227
    %603 = vmatpush.msra.mxu0 %v223
    %604 = vmatpush.msra.mxu0 %v219
    %605 = vmatpush.msra.mxu0 %v215
    %606 = vmatpush.msra.mxu0 %v211
    %607 = vmatpush.msra.mxu0 %v207
    %608 = vmatpush.msra.mxu0 %v203
    %609 = vmatpush.msra.mxu0 %v199
    %610 = vmatpush.msra.mxu0 %v195
    %611 = vmatpush.msra.mxu0 %v191
    %612 = vmatpush.msra.mxu0 %v187
    %613 = vmatmul.f32.gmra.mxu0 %v571
    %v614 = vpop.f32.mrf.mxu0
    %v615 = vadd.f32 0.0, %v614
    %616 = vdwg.mxu0
    %617 = vmatpush.msra.mxu0 %v248
    %618 = vmatpush.msra.mxu0 %v244
    %619 = vmatpush.msra.mxu0 %v240
    %620 = vmatpush.msra.mxu0 %v236
    %621 = vmatpush.msra.mxu0 %v232
    %622 = vmatpush.msra.mxu0 %v228
    %623 = vmatpush.msra.mxu0 %v224
    %624 = vmatpush.msra.mxu0 %v220
    %625 = vmatpush.msra.mxu0 %v216
    %626 = vmatpush.msra.mxu0 %v212
    %627 = vmatpush.msra.mxu0 %v208
    %628 = vmatpush.msra.mxu0 %v204
    %629 = vmatpush.msra.mxu0 %v200
    %630 = vmatpush.msra.mxu0 %v196
    %631 = vmatpush.msra.mxu0 %v192
    %632 = vmatpush.msra.mxu0 %v188
    %633 = vmatmul.f32.gmra.mxu0 %v571
    %v634 = vpop.f32.mrf.mxu0
    %v635 = vadd.f32 0.0, %v634
    %636 = vdwg.mxu0
    %637 = vmatpush.msra.mxu0 %v249
    %638 = vmatpush.msra.mxu0 %v245
    %639 = vmatpush.msra.mxu0 %v241
    %640 = vmatpush.msra.mxu0 %v237
    %641 = vmatpush.msra.mxu0 %v233
    %642 = vmatpush.msra.mxu0 %v229
    %643 = vmatpush.msra.mxu0 %v225
    %644 = vmatpush.msra.mxu0 %v221
    %645 = vmatpush.msra.mxu0 %v217
    %646 = vmatpush.msra.mxu0 %v213
    %647 = vmatpush.msra.mxu0 %v209
    %648 = vmatpush.msra.mxu0 %v205
    %649 = vmatpush.msra.mxu0 %v201
    %650 = vmatpush.msra.mxu0 %v197
    %651 = vmatpush.msra.mxu0 %v193
    %652 = vmatpush.msra.mxu0 %v189
    %653 = vmatmul.f32.gmra.mxu0 %v571
    %v654 = vpop.f32.mrf.mxu0
    %v655 = vadd.f32 0.0, %v654
    %656 = vdwg.mxu0
    %v657 = vadd.f32 %v573, %v595
    %v658 = vadd.f32 %v574, %v615
    %v659 = vadd.f32 %v575, %v635
    %v660 = vadd.f32 %v576, %v655
    %v661 = vmul.f32 %v657, 0.5
    %v662 = vmul.f32 %v658, 0.5
    %v663 = vmul.f32 %v659, 0.5
    %v664 = vtanh.pop %v661
    %v665 = vtanh.pop %v662
    %v666 = vtanh.pop %v663
    %v667 = vmul.f32 %v664, 0.5
    %v668 = vmul.f32 %v665, 0.5
    %v669 = vmul.f32 %v666, 0.5
    %v670 = vadd.f32 %v667, 0.5
    %v671 = vadd.f32 %v668, 0.5
    %v672 = vadd.f32 %v669, 0.5
    %v673 = vtanh.pop %v660
    %v674 = vmul.f32 %v671, %v569
    %v675 = vmul.f32 %v670, %v673
    %v676 = vadd.f32 %v674, %v675
    %v677 = vtanh.pop %v676
    %v678 = vmul.f32 %v672, %v677
    %s679 = scalar_lea.vmem [#allocation4], 128
    %v680 = vld [vmem:[%s679] sm:$0xff]
    %v681 = vld [vmem:[%s679 + $0x8] sm:$0xff]
    %v682 = vld [vmem:[%s679 + $0x10] sm:$0xff]
    %v683 = vld [vmem:[%s679 + $0x18] sm:$0xff]
    %684 = vmatpush.msra.mxu0 %v246
    %685 = vmatpush.msra.mxu0 %v242
    %686 = vmatpush.msra.mxu0 %v238
    %687 = vmatpush.msra.mxu0 %v234
    %688 = vmatpush.msra.mxu0 %v230
    %689 = vmatpush.msra.mxu0 %v226
    %690 = vmatpush.msra.mxu0 %v222
    %691 = vmatpush.msra.mxu0 %v218
    %692 = vmatpush.msra.mxu0 %v214
    %693 = vmatpush.msra.mxu0 %v210
    %694 = vmatpush.msra.mxu0 %v206
    %695 = vmatpush.msra.mxu0 %v202
    %696 = vmatpush.msra.mxu0 %v198
    %697 = vmatpush.msra.mxu0 %v194
    %698 = vmatpush.msra.mxu0 %v190
    %699 = vmatpush.msra.mxu0 %v186
    %700 = vmatmul.f32.gmra.mxu0 %v678
    %v701 = vpop.f32.mrf.mxu0
    %v702 = vadd.f32 0.0, %v701
    %703 = vdwg.mxu0
    %704 = vmatpush.msra.mxu0 %v247
    %705 = vmatpush.msra.mxu0 %v243
    %706 = vmatpush.msra.mxu0 %v239
    %707 = vmatpush.msra.mxu0 %v235
    %708 = vmatpush.msra.mxu0 %v231
    %709 = vmatpush.msra.mxu0 %v227
    %710 = vmatpush.msra.mxu0 %v223
    %711 = vmatpush.msra.mxu0 %v219
    %712 = vmatpush.msra.mxu0 %v215
    %713 = vmatpush.msra.mxu0 %v211
    %714 = vmatpush.msra.mxu0 %v207
    %715 = vmatpush.msra.mxu0 %v203
    %716 = vmatpush.msra.mxu0 %v199
    %717 = vmatpush.msra.mxu0 %v195
    %718 = vmatpush.msra.mxu0 %v191
    %719 = vmatpush.msra.mxu0 %v187
    %720 = vmatmul.f32.gmra.mxu0 %v678
    %v721 = vpop.f32.mrf.mxu0
    %v722 = vadd.f32 0.0, %v721
    %723 = vdwg.mxu0
    %724 = vmatpush.msra.mxu0 %v248
    %725 = vmatpush.msra.mxu0 %v244
    %726 = vmatpush.msra.mxu0 %v240
    %727 = vmatpush.msra.mxu0 %v236
    %728 = vmatpush.msra.mxu0 %v232
    %729 = vmatpush.msra.mxu0 %v228
    %730 = vmatpush.msra.mxu0 %v224
    %731 = vmatpush.msra.mxu0 %v220
    %732 = vmatpush.msra.mxu0 %v216
    %733 = vmatpush.msra.mxu0 %v212
    %734 = vmatpush.msra.mxu0 %v208
    %735 = vmatpush.msra.mxu0 %v204
    %736 = vmatpush.msra.mxu0 %v200
    %737 = vmatpush.msra.mxu0 %v196
    %738 = vmatpush.msra.mxu0 %v192
    %739 = vmatpush.msra.mxu0 %v188
    %740 = vmatmul.f32.gmra.mxu0 %v678
    %v741 = vpop.f32.mrf.mxu0
    %v742 = vadd.f32 0.0, %v741
    %743 = vdwg.mxu0
    %744 = vmatpush.msra.mxu0 %v249
    %745 = vmatpush.msra.mxu0 %v245
    %746 = vmatpush.msra.mxu0 %v241
    %747 = vmatpush.msra.mxu0 %v237
    %748 = vmatpush.msra.mxu0 %v233
    %749 = vmatpush.msra.mxu0 %v229
    %750 = vmatpush.msra.mxu0 %v225
    %751 = vmatpush.msra.mxu0 %v221
    %752 = vmatpush.msra.mxu0 %v217
    %753 = vmatpush.msra.mxu0 %v213
    %754 = vmatpush.msra.mxu0 %v209
    %755 = vmatpush.msra.mxu0 %v205
    %756 = vmatpush.msra.mxu0 %v201
    %757 = vmatpush.msra.mxu0 %v197
    %758 = vmatpush.msra.mxu0 %v193
    %759 = vmatpush.msra.mxu0 %v189
    %760 = vmatmul.f32.gmra.mxu0 %v678
    %v761 = vpop.f32.mrf.mxu0
    %v762 = vadd.f32 0.0, %v761
    %763 = vdwg.mxu0
    %v764 = vadd.f32 %v680, %v702
    %v765 = vadd.f32 %v681, %v722
    %v766 = vadd.f32 %v682, %v742
    %v767 = vadd.f32 %v683, %v762
    %v768 = vmul.f32 %v764, 0.5
    %v769 = vmul.f32 %v765, 0.5
    %v770 = vmul.f32 %v766, 0.5
    %v771 = vtanh.pop %v768
    %v772 = vtanh.pop %v769
    %v773 = vtanh.pop %v770
    %v774 = vmul.f32 %v771, 0.5
    %v775 = vmul.f32 %v772, 0.5
    %v776 = vmul.f32 %v773, 0.5
    %v777 = vadd.f32 %v774, 0.5
    %v778 = vadd.f32 %v775, 0.5
    %v779 = vadd.f32 %v776, 0.5
    %v780 = vtanh.pop %v767
    %v781 = vmul.f32 %v778, %v676
    %v782 = vmul.f32 %v777, %v780
    %v783 = vadd.f32 %v781, %v782
    %v784 = vtanh.pop %v783
    %v785 = vmul.f32 %v779, %v784
    %s786 = scalar_lea.vmem [#allocation4], 160
    %v787 = vld [vmem:[%s786] sm:$0xff]
    %v788 = vld [vmem:[%s786 + $0x8] sm:$0xff]
    %v789 = vld [vmem:[%s786 + $0x10] sm:$0xff]
    %v790 = vld [vmem:[%s786 + $0x18] sm:$0xff]
    %791 = vmatpush.msra.mxu0 %v246
    %792 = vmatpush.msra.mxu0 %v242
    %793 = vmatpush.msra.mxu0 %v238
    %794 = vmatpush.msra.mxu0 %v234
    %795 = vmatpush.msra.mxu0 %v230
    %796 = vmatpush.msra.mxu0 %v226
    %797 = vmatpush.msra.mxu0 %v222
    %798 = vmatpush.msra.mxu0 %v218
    %799 = vmatpush.msra.mxu0 %v214
    %800 = vmatpush.msra.mxu0 %v210
    %801 = vmatpush.msra.mxu0 %v206
    %802 = vmatpush.msra.mxu0 %v202
    %803 = vmatpush.msra.mxu0 %v198
    %804 = vmatpush.msra.mxu0 %v194
    %805 = vmatpush.msra.mxu0 %v190
    %806 = vmatpush.msra.mxu0 %v186
    %807 = vmatmul.f32.gmra.mxu0 %v785
    %v808 = vpop.f32.mrf.mxu0
    %v809 = vadd.f32 0.0, %v808
    %810 = vdwg.mxu0
    %811 = vmatpush.msra.mxu0 %v247
    %812 = vmatpush.msra.mxu0 %v243
    %813 = vmatpush.msra.mxu0 %v239
    %814 = vmatpush.msra.mxu0 %v235
    %815 = vmatpush.msra.mxu0 %v231
    %816 = vmatpush.msra.mxu0 %v227
    %817 = vmatpush.msra.mxu0 %v223
    %818 = vmatpush.msra.mxu0 %v219
    %819 = vmatpush.msra.mxu0 %v215
    %820 = vmatpush.msra.mxu0 %v211
    %821 = vmatpush.msra.mxu0 %v207
    %822 = vmatpush.msra.mxu0 %v203
    %823 = vmatpush.msra.mxu0 %v199
    %824 = vmatpush.msra.mxu0 %v195
    %825 = vmatpush.msra.mxu0 %v191
    %826 = vmatpush.msra.mxu0 %v187
    %827 = vmatmul.f32.gmra.mxu0 %v785
    %v828 = vpop.f32.mrf.mxu0
    %v829 = vadd.f32 0.0, %v828
    %830 = vdwg.mxu0
    %831 = vmatpush.msra.mxu0 %v248
    %832 = vmatpush.msra.mxu0 %v244
    %833 = vmatpush.msra.mxu0 %v240
    %834 = vmatpush.msra.mxu0 %v236
    %835 = vmatpush.msra.mxu0 %v232
    %836 = vmatpush.msra.mxu0 %v228
    %837 = vmatpush.msra.mxu0 %v224
    %838 = vmatpush.msra.mxu0 %v220
    %839 = vmatpush.msra.mxu0 %v216
    %840 = vmatpush.msra.mxu0 %v212
    %841 = vmatpush.msra.mxu0 %v208
    %842 = vmatpush.msra.mxu0 %v204
    %843 = vmatpush.msra.mxu0 %v200
    %844 = vmatpush.msra.mxu0 %v196
    %845 = vmatpush.msra.mxu0 %v192
    %846 = vmatpush.msra.mxu0 %v188
    %847 = vmatmul.f32.gmra.mxu0 %v785
    %v848 = vpop.f32.mrf.mxu0
    %v849 = vadd.f32 0.0, %v848
    %850 = vdwg.mxu0
    %851 = vmatpush.msra.mxu0 %v249
    %852 = vmatpush.msra.mxu0 %v245
    %853 = vmatpush.msra.mxu0 %v241
    %854 = vmatpush.msra.mxu0 %v237
    %855 = vmatpush.msra.mxu0 %v233
    %856 = vmatpush.msra.mxu0 %v229
    %857 = vmatpush.msra.mxu0 %v225
    %858 = vmatpush.msra.mxu0 %v221
    %859 = vmatpush.msra.mxu0 %v217
    %860 = vmatpush.msra.mxu0 %v213
    %861 = vmatpush.msra.mxu0 %v209
    %862 = vmatpush.msra.mxu0 %v205
    %863 = vmatpush.msra.mxu0 %v201
    %864 = vmatpush.msra.mxu0 %v197
    %865 = vmatpush.msra.mxu0 %v193
    %866 = vmatpush.msra.mxu0 %v189
    %867 = vmatmul.f32.gmra.mxu0 %v785
    %v868 = vpop.f32.mrf.mxu0
    %v869 = vadd.f32 0.0, %v868
    %870 = vdwg.mxu0
    %v871 = vadd.f32 %v787, %v809
    %v872 = vadd.f32 %v788, %v829
    %v873 = vadd.f32 %v789, %v849
    %v874 = vadd.f32 %v790, %v869
    %v875 = vmul.f32 %v871, 0.5
    %v876 = vmul.f32 %v872, 0.5
    %v877 = vmul.f32 %v873, 0.5
    %v878 = vtanh.pop %v875
    %v879 = vtanh.pop %v876
    %v880 = vtanh.pop %v877
    %v881 = vmul.f32 %v878, 0.5
    %v882 = vmul.f32 %v879, 0.5
    %v883 = vmul.f32 %v880, 0.5
    %v884 = vadd.f32 %v881, 0.5
    %v885 = vadd.f32 %v882, 0.5
    %v886 = vadd.f32 %v883, 0.5
    %v887 = vtanh.pop %v874
    %v888 = vmul.f32 %v885, %v783
    %v889 = vmul.f32 %v884, %v887
    %v890 = vadd.f32 %v888, %v889
    %v891 = vtanh.pop %v890
    %v892 = vmul.f32 %v886, %v891
    %s893 = scalar_lea.vmem [#allocation4], 192
    %v894 = vld [vmem:[%s893] sm:$0xff]
    %v895 = vld [vmem:[%s893 + $0x8] sm:$0xff]
    %v896 = vld [vmem:[%s893 + $0x10] sm:$0xff]
    %v897 = vld [vmem:[%s893 + $0x18] sm:$0xff]
    %898 = vmatpush.msra.mxu0 %v246
    %899 = vmatpush.msra.mxu0 %v242
    %900 = vmatpush.msra.mxu0 %v238
    %901 = vmatpush.msra.mxu0 %v234
    %902 = vmatpush.msra.mxu0 %v230
    %903 = vmatpush.msra.mxu0 %v226
    %904 = vmatpush.msra.mxu0 %v222
    %905 = vmatpush.msra.mxu0 %v218
    %906 = vmatpush.msra.mxu0 %v214
    %907 = vmatpush.msra.mxu0 %v210
    %908 = vmatpush.msra.mxu0 %v206
    %909 = vmatpush.msra.mxu0 %v202
    %910 = vmatpush.msra.mxu0 %v198
    %911 = vmatpush.msra.mxu0 %v194
    %912 = vmatpush.msra.mxu0 %v190
    %913 = vmatpush.msra.mxu0 %v186
    %914 = vmatmul.f32.gmra.mxu0 %v892
    %v915 = vpop.f32.mrf.mxu0
    %v916 = vadd.f32 0.0, %v915
    %917 = vdwg.mxu0
    %918 = vmatpush.msra.mxu0 %v247
    %919 = vmatpush.msra.mxu0 %v243
    %920 = vmatpush.msra.mxu0 %v239
    %921 = vmatpush.msra.mxu0 %v235
    %922 = vmatpush.msra.mxu0 %v231
    %923 = vmatpush.msra.mxu0 %v227
    %924 = vmatpush.msra.mxu0 %v223
    %925 = vmatpush.msra.mxu0 %v219
    %926 = vmatpush.msra.mxu0 %v215
    %927 = vmatpush.msra.mxu0 %v211
    %928 = vmatpush.msra.mxu0 %v207
    %929 = vmatpush.msra.mxu0 %v203
    %930 = vmatpush.msra.mxu0 %v199
    %931 = vmatpush.msra.mxu0 %v195
    %932 = vmatpush.msra.mxu0 %v191
    %933 = vmatpush.msra.mxu0 %v187
    %934 = vmatmul.f32.gmra.mxu0 %v892
    %v935 = vpop.f32.mrf.mxu0
    %v936 = vadd.f32 0.0, %v935
    %937 = vdwg.mxu0
    %938 = vmatpush.msra.mxu0 %v248
    %939 = vmatpush.msra.mxu0 %v244
    %940 = vmatpush.msra.mxu0 %v240
    %941 = vmatpush.msra.mxu0 %v236
    %942 = vmatpush.msra.mxu0 %v232
    %943 = vmatpush.msra.mxu0 %v228
    %944 = vmatpush.msra.mxu0 %v224
    %945 = vmatpush.msra.mxu0 %v220
    %946 = vmatpush.msra.mxu0 %v216
    %947 = vmatpush.msra.mxu0 %v212
    %948 = vmatpush.msra.mxu0 %v208
    %949 = vmatpush.msra.mxu0 %v204
    %950 = vmatpush.msra.mxu0 %v200
    %951 = vmatpush.msra.mxu0 %v196
    %952 = vmatpush.msra.mxu0 %v192
    %953 = vmatpush.msra.mxu0 %v188
    %954 = vmatmul.f32.gmra.mxu0 %v892
    %v955 = vpop.f32.mrf.mxu0
    %v956 = vadd.f32 0.0, %v955
    %957 = vdwg.mxu0
    %958 = vmatpush.msra.mxu0 %v249
    %959 = vmatpush.msra.mxu0 %v245
    %960 = vmatpush.msra.mxu0 %v241
    %961 = vmatpush.msra.mxu0 %v237
    %962 = vmatpush.msra.mxu0 %v233
    %963 = vmatpush.msra.mxu0 %v229
    %964 = vmatpush.msra.mxu0 %v225
    %965 = vmatpush.msra.mxu0 %v221
    %966 = vmatpush.msra.mxu0 %v217
    %967 = vmatpush.msra.mxu0 %v213
    %968 = vmatpush.msra.mxu0 %v209
    %969 = vmatpush.msra.mxu0 %v205
    %970 = vmatpush.msra.mxu0 %v201
    %971 = vmatpush.msra.mxu0 %v197
    %972 = vmatpush.msra.mxu0 %v193
    %973 = vmatpush.msra.mxu0 %v189
    %974 = vmatmul.f32.gmra.mxu0 %v892
    %v975 = vpop.f32.mrf.mxu0
    %v976 = vadd.f32 0.0, %v975
    %977 = vdwg.mxu0
    %v978 = vadd.f32 %v894, %v916
    %v979 = vadd.f32 %v895, %v936
    %v980 = vadd.f32 %v896, %v956
    %v981 = vadd.f32 %v897, %v976
    %v982 = vmul.f32 %v978, 0.5
    %v983 = vmul.f32 %v979, 0.5
    %v984 = vmul.f32 %v980, 0.5
    %v985 = vtanh.pop %v982
    %v986 = vtanh.pop %v983
    %v987 = vtanh.pop %v984
    %v988 = vmul.f32 %v985, 0.5
    %v989 = vmul.f32 %v986, 0.5
    %v990 = vmul.f32 %v987, 0.5
    %v991 = vadd.f32 %v988, 0.5
    %v992 = vadd.f32 %v989, 0.5
    %v993 = vadd.f32 %v990, 0.5
    %v994 = vtanh.pop %v981
    %v995 = vmul.f32 %v992, %v890
    %v996 = vmul.f32 %v991, %v994
    %v997 = vadd.f32 %v995, %v996
    %v998 = vtanh.pop %v997
    %v999 = vmul.f32 %v993, %v998
    %1000 = vst [vmem:[#allocation2] sm:$0xff] %v999
    %1001 = vst [vmem:[#allocation3] sm:$0xff] %v997
    %1002 = vst [vmem:[#allocation8] sm:$0xff] %v999
    // Predicated region
    $region26: #{tpu_custom_call.1} parent=1 // pred_check
      _
    $region27: #{tpu_custom_call.1} parent=1 // pred_check_branch
      %1004 = sbr.rel (0) target = $region29
    $region28: #{tpu_custom_call.1} parent=1 // pred_region
      %1006 = vsyncadd [#allocation7], 0
      %s1008 = sshll.u32 [#allocation8], 4
      %s1009 = int_to_ptr.vmem [resolvable:$true] %s1008
      %s1010 = sshll.u32 %s4, 4
      %s1011 = int_to_ptr.hbm [resolvable:$true] %s1010
      %1013 = dma.vmem_to_hbm [thread:$0]  %s1009, 128, %s1011, [#allocation7]
    $region29: #{tpu_custom_call.1} parent=1 // pred_fallthru
      _
    // Predicated region
    $region30: #{tpu_custom_call.1} parent=1 // pred_check
      _
    $region31: #{tpu_custom_call.1} parent=1 // pred_check_branch
      %1015 = sbr.rel (0) target = $region33
    $region32: #{tpu_custom_call.1} parent=1 // pred_region
      %1017 = dma.done [#allocation7], 128
    $region33: #{tpu_custom_call.1} parent=1 // pred_fallthru
      _
    %1018 = vsyncpa [#allocation6], 1
    %1019 = vsyncpa [#allocation7], 1

</llo_original>
